<compile_context>
chip_gen: v7x
topology: tpu7x:2x2x1
jax: 0.10.0
libtpu: 0.0.40
codegen_flags: <defaults>
</compile_context>

<pallas_src>
import functools

import jax
import jax.numpy as jnp
from jax.experimental import pallas as pl
from jax.experimental.pallas import tpu as pltpu


def _batchnorm_kernel(x_ref, gamma_ref, beta_ref, out_ref, *, eps):
    # One (N, TILE_D) lane-dense tile; reduction runs over the batch axis only.
    x = x_ref[...]                                    # (N, TILE_D) float32
    n = x.shape[0]
    inv_n = 1.0 / n

    # mean / centered values (matches torch: input - 1/N * input.sum(0))
    mean = jnp.sum(x, axis=0, keepdims=True) * inv_n  # (1, TILE_D)
    shifted = x - mean                                # (N, TILE_D)

    # biased variance (unbiased=False)
    var = jnp.sum(shifted * shifted, axis=0, keepdims=True) * inv_n  # (1, TILE_D)

    # single fused EUP op: 1 / sqrt(var + eps)
    inv_std = jax.lax.rsqrt(var + eps)                # (1, TILE_D)

    x_hat = shifted * inv_std                         # (N, TILE_D)
    out_ref[...] = gamma_ref[...] * x_hat + beta_ref[...]


def _round_up(v, m):
    return ((v + m - 1) // m) * m


def custom_batchnorm_forward(x, gamma, beta, eps=1e-05):
    """x: (N, D) float32, gamma/beta: (D,) float32 -> (N, D) float32."""
    n, d = x.shape

    # ---- choose a lane-dense feature tile sized for the smallest VMEM (v7x) ----
    # Resident footprint per grid step ~ 4 * N * TILE_D * 4B (in + out, double
    # buffered, fp32).  Keep it under ~24 MiB => safe on v5e/v6e/v7x.
    vmem_budget_bytes = 24 * 1024 * 1024
    bytes_per_feature_col = 4 * n * 4                  # 2 buffers in + 2 out, fp32
    tile_d = vmem_budget_bytes // max(bytes_per_feature_col, 1)
    tile_d = max(128, min(2048, (tile_d // 128) * 128))  # clamp to [128, 2048], /128
    tile_d = min(tile_d, _round_up(d, 128))              # don't exceed (padded) D

    # ---- pad feature axis so every block is full and lane-dense ----
    d_pad = _round_up(d, tile_d)
    if d_pad != d:
        x = jnp.pad(x, ((0, 0), (0, d_pad - d)))
        gamma = jnp.pad(gamma, (0, d_pad - d))
        beta = jnp.pad(beta, (0, d_pad - d))
    gamma2d = gamma.reshape(1, d_pad)
    beta2d = beta.reshape(1, d_pad)

    grid_d = d_pad // tile_d

    out = pl.pallas_call(
        functools.partial(_batchnorm_kernel, eps=eps),
        out_shape=jax.ShapeDtypeStruct((n, d_pad), x.dtype),
        grid_spec=pltpu.PrefetchScalarGridSpec(
            num_scalar_prefetch=0,
            grid=(grid_d,),
            in_specs=[
                pl.BlockSpec((n, tile_d), lambda j: (0, j)),
                pl.BlockSpec((1, tile_d), lambda j: (0, j)),
                pl.BlockSpec((1, tile_d), lambda j: (0, j)),
            ],
            out_specs=pl.BlockSpec((n, tile_d), lambda j: (0, j)),
        ),
        compiler_params=pltpu.CompilerParams(
            dimension_semantics=("parallel",),          # megacore sharding on v7x
            vmem_limit_bytes=48 * 1024 * 1024,
        ),
        cost_estimate=pl.CostEstimate(
            flops=int(5 * n * d_pad),
            transcendentals=int(d_pad),
            bytes_accessed=int(2 * n * d_pad * 4 + 2 * d_pad * 4),
        ),
    )(x, gamma2d, beta2d)

    if d_pad != d:
        out = out[:, :d]
    return out


def reference_forward(x, gamma, beta, eps=1e-05):
    n = x.shape[0]
    shifted = x - jnp.sum(x, axis=0) / n
    var = jnp.sum(shifted ** 2, axis=0) / n
    x_hat = shifted / jnp.sqrt(var + eps)
    return gamma * x_hat + beta


if __name__ == "__main__":
    key = jax.random.PRNGKey(0)
    n_batch, n_neurons = 8, 32

    x = jax.random.normal(key, (n_batch, n_neurons), dtype=jnp.float32)

    # Deterministic parameter init, matching the module's __init__:
    #   beta = zeros(n_neurons), gamma = ones(n_neurons)
    gamma = jnp.ones((n_neurons,), dtype=jnp.float32)
    beta = jnp.zeros((n_neurons,), dtype=jnp.float32)

    out = custom_batchnorm_forward(x, gamma, beta)
    out = jax.block_until_ready(out)

    ref = reference_forward(x, gamma, beta)
    assert out.shape == (n_batch, n_neurons)
    assert jnp.allclose(out, ref, atol=1e-5, rtol=1e-5)

    print("KERNEL_OK")
</pallas_src>

<mosaic_0001>
module attributes {stable_mosaic.version = 11 : i64} {
  func.func @_batchnorm_kernel(%arg0: i32, %arg1: memref<8x128xf32, #tpu.memory_space<vmem>>, %arg2: memref<1x128xf32, #tpu.memory_space<vmem>>, %arg3: memref<1x128xf32, #tpu.memory_space<vmem>>, %arg4: memref<8x128xf32, #tpu.memory_space<vmem>>) attributes {dimension_semantics = [#tpu.dimension_semantics<parallel>], iteration_bounds = array<i64: 1>, scalar_prefetch = 0 : i64, scratch_operands = 0 : i64, tpu.core_type = #tpu.core_type<tc>, window_params = [{transform_indices = @transform_0, window_bounds = array<i64: 8, 128>}, {transform_indices = @transform_1, window_bounds = array<i64: 1, 128>}, {transform_indices = @transform_2, window_bounds = array<i64: 1, 128>}, {transform_indices = @transform_3, window_bounds = array<i64: 8, 128>}]} {
    %c0 = arith.constant 0 : index
    %c0_0 = arith.constant 0 : index
    %0 = vector.load %arg1[%c0, %c0_0] : memref<8x128xf32, #tpu.memory_space<vmem>>, vector<8x128xf32>
    %cst = arith.constant dense<0.000000e+00> : vector<128xf32>
    %1 = vector.multi_reduction <add>, %0, %cst [0] : vector<8x128xf32> to vector<128xf32>
    %2 = vector.shape_cast %1 : vector<128xf32> to vector<1x128xf32>
    %cst_1 = arith.constant 1.250000e-01 : f32
    %3 = vector.broadcast %cst_1 : f32 to vector<1x128xf32>
    %4 = arith.mulf %2, %3 : vector<1x128xf32>
    %5 = vector.broadcast %4 : vector<1x128xf32> to vector<8x128xf32>
    %6 = arith.subf %0, %5 : vector<8x128xf32>
    %7 = arith.mulf %6, %6 : vector<8x128xf32>
    %cst_2 = arith.constant dense<0.000000e+00> : vector<128xf32>
    %8 = vector.multi_reduction <add>, %7, %cst_2 [0] : vector<8x128xf32> to vector<128xf32>
    %9 = vector.shape_cast %8 : vector<128xf32> to vector<1x128xf32>
    %cst_3 = arith.constant 1.250000e-01 : f32
    %10 = vector.broadcast %cst_3 : f32 to vector<1x128xf32>
    %11 = arith.mulf %9, %10 : vector<1x128xf32>
    %cst_4 = arith.constant 9.99999974E-6 : f32
    %12 = vector.broadcast %cst_4 : f32 to vector<1x128xf32>
    %13 = arith.addf %11, %12 : vector<1x128xf32>
    %14 = math.rsqrt %13 : vector<1x128xf32>
    %15 = vector.broadcast %14 : vector<1x128xf32> to vector<8x128xf32>
    %16 = arith.mulf %6, %15 : vector<8x128xf32>
    %c0_5 = arith.constant 0 : index
    %c0_6 = arith.constant 0 : index
    %17 = vector.load %arg2[%c0_5, %c0_6] : memref<1x128xf32, #tpu.memory_space<vmem>>, vector<1x128xf32>
    %18 = vector.broadcast %17 : vector<1x128xf32> to vector<8x128xf32>
    %19 = arith.mulf %18, %16 : vector<8x128xf32>
    %c0_7 = arith.constant 0 : index
    %c0_8 = arith.constant 0 : index
    %20 = vector.load %arg3[%c0_7, %c0_8] : memref<1x128xf32, #tpu.memory_space<vmem>>, vector<1x128xf32>
    %21 = vector.broadcast %20 : vector<1x128xf32> to vector<8x128xf32>
    %22 = arith.addf %19, %21 : vector<8x128xf32>
    %c0_9 = arith.constant 0 : index
    %c0_10 = arith.constant 0 : index
    %23 = vector.load %arg4[%c0_9, %c0_10] : memref<8x128xf32, #tpu.memory_space<vmem>>, vector<8x128xf32>
    tpu.vector_store %arg4[%c0_9, %c0_10], %22 {strides = array<i32>} : memref<8x128xf32, #tpu.memory_space<vmem>>, vector<8x128xf32>,
    return
  }
  func.func @transform_0(%arg0: i32) -> (i32, i32) {
    %c0_i32 = arith.constant 0 : i32
    %c0_i32_0 = arith.constant 0 : i32
    return %c0_i32, %arg0 : i32, i32
  }
  func.func @transform_1(%arg0: i32) -> (i32, i32) {
    %c0_i32 = arith.constant 0 : i32
    %c0_i32_0 = arith.constant 0 : i32
    return %c0_i32, %arg0 : i32, i32
  }
  func.func @transform_2(%arg0: i32) -> (i32, i32) {
    %c0_i32 = arith.constant 0 : i32
    %c0_i32_0 = arith.constant 0 : i32
    return %c0_i32, %arg0 : i32, i32
  }
  func.func @transform_3(%arg0: i32) -> (i32, i32) {
    %c0_i32 = arith.constant 0 : i32
    %c0_i32_0 = arith.constant 0 : i32
    return %c0_i32, %arg0 : i32, i32
  }
}

</mosaic_0001>

<llo_original>
// kernel: tpu_custom_call.1
$region0: #{tpu_custom_call.1}
  #allocation0 [shape = 'u32[]', space=smem, size = 0x4, offset = 0x4, fixed_abs, tag = 'smem constant byte address 0x4 - core index']
  #allocation1 [shape = 'u32[144,128]{1,0:T(1,128)}', space=vmem, size = 0x12000, scoped, tag = 'internal scratch']
  %s0 = inlined_call_operand.hbm [shape: f32[8,128], index: 0, kind: input, shape index: {}]
  %s1 = inlined_call_operand.vmem [shape: f32[1,128], index: 1, kind: input, shape index: {}]
  %s2 = inlined_call_operand.vmem [shape: f32[1,128], index: 2, kind: input, shape index: {}]
  %s3 = inlined_call_operand.hbm [shape: f32[8,128], index: 3, kind: output, shape index: {}]
  %s4 = sld [smem:[#allocation0]]
  $region26: #{tpu_custom_call.1} parent=0
    _
  %s6 = ssub.s32 1, %s4
  %s7 = scalar_select 0, %s6, %s4
  $region1: #{tpu_custom_call.1} parent=0
    #allocation2 [shape = 'u8[4096]{0}', space=vmem, size = 0x1000, scoped, tag = 'input window, operand 0, single buffered']
    #allocation3 [shape = 's32[1]{0}', space=sflag, size = 0x4, scoped, tag = 'scoped memory for tpu_custom_call.1']
    #allocation4 [shape = 's32[1]{0}', space=sflag, size = 0x4, scoped, tag = 'scoped memory for tpu_custom_call.1']
    #allocation5 [shape = 'u8[4096]{0}', space=vmem, size = 0x1000, scoped, tag = 'output window, operand 0, single buffered']
    %8 = vsyncpa [#allocation3], 0
    %9 = vsyncpa [#allocation4], 0
    // Predicated region
    $region2: #{tpu_custom_call.1} parent=1 // pred_check
      _
    $region3: #{tpu_custom_call.1} parent=1 // pred_check_branch
      %11 = sbr.rel (0) target = $region5
    $region4: #{tpu_custom_call.1} parent=1 // pred_region
      %s13 = ssub.s32 128, 128
      %14 = vsyncadd [#allocation3], %s13
      %s16 = sshll.u32 [#allocation2], 4
      %s17 = int_to_ptr.vmem [resolvable:$true] %s16
      %19 = dma.hbm_to_vmem [thread:$0]  %s0, 128, %s17, [#allocation3]
    $region5: #{tpu_custom_call.1} parent=1 // pred_fallthru
      _
    // Predicated region
    $region6: #{tpu_custom_call.1} parent=1 // pred_check
      _
    $region7: #{tpu_custom_call.1} parent=1 // pred_check_branch
      %21 = sbr.rel (0) target = $region9
    $region8: #{tpu_custom_call.1} parent=1 // pred_region
      _
    $region9: #{tpu_custom_call.1} parent=1 // pred_fallthru
      _
    // Predicated region
    $region10: #{tpu_custom_call.1} parent=1 // pred_check
      _
    $region11: #{tpu_custom_call.1} parent=1 // pred_check_branch
      %23 = sbr.rel (0) target = $region13
    $region12: #{tpu_custom_call.1} parent=1 // pred_region
      _
    $region13: #{tpu_custom_call.1} parent=1 // pred_fallthru
      _
    // Predicated region
    $region14: #{tpu_custom_call.1} parent=1 // pred_check
      _
    $region15: #{tpu_custom_call.1} parent=1 // pred_check_branch
      %25 = sbr.rel (0) target = $region17
    $region16: #{tpu_custom_call.1} parent=1 // pred_region
      %26 = dma.done [#allocation3], 128
    $region17: #{tpu_custom_call.1} parent=1 // pred_fallthru
      _
    %v27 = vld [vmem:[#allocation2] sm:$0xff]
    %v28 = vrot.slane %v27, 4
    %v29 = vadd.f32 %v27, %v28
    %v30 = vrot.slane %v29, 2
    %v31 = vadd.f32 %v29, %v30
    %v32 = vrot.slane %v31, 1
    %v33 = vadd.f32 %v31, %v32
    %v34 = vmul.f32 %v33, 0.125
    %v35 = vsub.f32 %v27, %v34
    %v36 = vmul.f32 %v35, %v35
    %v37 = vrot.slane %v36, 4
    %v38 = vadd.f32 %v36, %v37
    %v39 = vrot.slane %v38, 2
    %v40 = vadd.f32 %v38, %v39
    %v41 = vrot.slane %v40, 1
    %v42 = vadd.f32 %v40, %v41
    %v43 = vmul.f32 %v42, 0.125
    %v44 = vadd.f32 %v43, 1e-05
    %v45 = vrsqrt.pop %v44
    %v46 = vmul.f32 %v35, %v45
    %v47 = vld [vmem:[%s1] sm:$0x1]
    %v49 = vlaneseq
    %v50 = vshrl.u32 %v49, 7
    %v51 = vsub.s32 0, %v50
    %v52 = vrot.slane %v47, %v51
    %v54 = vmul.f32 %v52, %v46
    %v55 = vld [vmem:[%s2] sm:$0x1]
    %v57 = vlaneseq
    %v58 = vshrl.u32 %v57, 7
    %v59 = vsub.s32 0, %v58
    %v60 = vrot.slane %v55, %v59
    %v62 = vadd.f32 %v54, %v60
    %63 = vst [vmem:[#allocation5] sm:$0xff] %v62
    // Predicated region
    $region18: #{tpu_custom_call.1} parent=1 // pred_check
      _
    $region19: #{tpu_custom_call.1} parent=1 // pred_check_branch
      %65 = sbr.rel (0) target = $region21
    $region20: #{tpu_custom_call.1} parent=1 // pred_region
      %s67 = ssub.s32 128, 128
      %68 = vsyncadd [#allocation4], %s67
      %s70 = sshll.u32 [#allocation5], 4
      %s71 = int_to_ptr.vmem [resolvable:$true] %s70
      %73 = dma.vmem_to_hbm [thread:$0]  %s71, 128, %s3, [#allocation4]
    $region21: #{tpu_custom_call.1} parent=1 // pred_fallthru
      _
    // Predicated region
    $region22: #{tpu_custom_call.1} parent=1 // pred_check
      _
    $region23: #{tpu_custom_call.1} parent=1 // pred_check_branch
      %75 = sbr.rel (0) target = $region25
    $region24: #{tpu_custom_call.1} parent=1 // pred_region
      %76 = dma.done [#allocation4], 128
    $region25: #{tpu_custom_call.1} parent=1 // pred_fallthru
      _
    %77 = vsyncpa [#allocation3], 1
    %78 = vsyncpa [#allocation4], 1

</llo_original>
